<compile_context>
chip_gen: v6e
topology: v6e:2x2x1
jax: 0.10.0
libtpu: 0.0.40
codegen_flags: <defaults>
</compile_context>

<pallas_src>
import functools

import jax
import jax.numpy as jnp
from jax.experimental import pallas as pl
from jax.experimental.pallas import tpu as pltpu

IN_F = 6
HID = 128
OUT_F = 1
BN_EPS = 1e-5


def _round_up(x, m):
    return (x + m - 1) // m * m


def _mlp_kernel(xT_ref, w1_ref, b1_ref, w2_ref, b2_ref, wo_ref, o_ref):
    """Feature-major fused 3-layer MLP (BN + biases pre-folded) for one batch tile.

    Activations stay feature-major (features on sublanes, batch on lanes), so all
    three layers are plain MXU matmuls and the output row is lane-dense.

      xT_ref : (6, TB)     compute dtype   x^T tile
      w1_ref : (128, 6)    compute dtype
      b1_ref : (128, 1)    f32
      w2_ref : (128, 128)  compute dtype   (BN1 scale folded in)
      b2_ref : (128, 1)    f32             (BN1 shift + b2 folded in)
      wo_ref : (1, 128)    compute dtype   (BN2 scale folded in)
      o_ref  : (1, TB)     f32             lane-dense; bo added in the wrapper
    """
    cdt = w1_ref.dtype

    # layer_1: h1^T = ReLU(W1 @ x^T + b1), materialized once in compute dtype.
    h1 = jnp.dot(w1_ref[...], xT_ref[...], preferred_element_type=jnp.float32)
    h1 = jnp.maximum(h1 + b1_ref[...], 0.0).astype(cdt)             # (128, TB)

    # layer_2 (+ folded BN1): h2^T = ReLU(W2' @ h1^T + b2').
    h2 = jnp.dot(w2_ref[...], h1, preferred_element_type=jnp.float32)
    h2 = jnp.maximum(h2 + b2_ref[...], 0.0).astype(cdt)             # (128, TB)

    # dropout (eval) = identity; layer_out (+ folded BN2): lane-dense (1, TB) row.
    out = jnp.dot(wo_ref[...], h2, preferred_element_type=jnp.float32)
    o_ref[...] = out.astype(o_ref.dtype)


@functools.partial(jax.jit, static_argnames=("max_tile_b", "compute_dtype"))
def binary_classification_2layer(x, params, *, max_tile_b=8192,
                                 compute_dtype=jnp.bfloat16):
    """x: (B, 6) float32.  Returns (B, 1) float32 logits (eval-mode forward)."""
    B = x.shape[0]

    (w1, b1, g1, be1, rm1, rv1,
     w2, b2, g2, be2, rm2, rv2,
     wo, bo) = params

    # ---- plain-JAX glue (constant work, runs once inside the jit) ----------
    # Fold eval-mode BatchNorm into per-feature scale/shift ...
    s1 = g1 / jnp.sqrt(rv1 + BN_EPS)
    t1 = be1 - rm1 * s1
    s2 = g2 / jnp.sqrt(rv2 + BN_EPS)
    t2 = be2 - rm2 * s2

    # ... then fold scale/shift (and biases) into the *downstream* weights so
    # the kernel only does matmul + bias + relu (feature-major form: W @ act^T).
    w1_c = w1.astype(compute_dtype)                                 # (128, 6)
    b1_c = b1.reshape(HID, 1).astype(jnp.float32)

    w2_f = (w2 * s1[None, :]).astype(compute_dtype)                 # (128, 128)
    b2_f = (t1 @ w2.T + b2).reshape(HID, 1).astype(jnp.float32)

    wo_f = (wo * s2[None, :]).astype(compute_dtype)                 # (1, 128)
    bo_f = (t2 @ wo.T + bo).reshape(1, OUT_F).astype(jnp.float32)   # added post-kernel

    # ---- batch tiling -------------------------------------------------------
    # tile_b is always a multiple of 128 (unmasked lane-dense output stores),
    # minimizes pad waste, and splits into >= 2 tiles for B > 256 (v7x megacore).
    if B <= 256:
        num_tiles = 1
        tile_b = _round_up(B, 128)
    else:
        cap = min(max_tile_b, _round_up((B + 1) // 2, 128))
        num_tiles = (B + cap - 1) // cap
        tile_b = _round_up((B + num_tiles - 1) // num_tiles, 128)
    B_pad = num_tiles * tile_b

    xT = x.astype(compute_dtype).T                                  # (6, B)
    if B_pad != B:
        xT = jnp.pad(xT, ((0, 0), (0, B_pad - B)))

    def const(shape):
        return pl.BlockSpec(shape, lambda i: (0, 0))

    out = pl.pallas_call(
        _mlp_kernel,
        out_shape=jax.ShapeDtypeStruct((1, B_pad), jnp.float32),
        grid_spec=pltpu.PrefetchScalarGridSpec(
            num_scalar_prefetch=0,
            grid=(num_tiles,),
            in_specs=[
                pl.BlockSpec((IN_F, tile_b), lambda i: (0, i)),     # x^T tile
                const((HID, IN_F)),                                 # W1
                const((HID, 1)),                                    # b1
                const((HID, HID)),                                  # W2' (BN1 folded)
                const((HID, 1)),                                    # b2' (BN1 folded)
                const((OUT_F, HID)),                                # Wo' (BN2 folded)
            ],
            out_specs=pl.BlockSpec((1, tile_b), lambda i: (0, i)),
        ),
        compiler_params=pltpu.CompilerParams(
            dimension_semantics=("parallel",),
            vmem_limit_bytes=32 * 1024 * 1024),
    )(xT, w1_c, b1_c, w2_f, b2_f, wo_f)

    # (1, B_pad) -> (B, 1); bo (+ folded BN2 shift) added here, not in-kernel.
    return out.reshape(B_pad)[:B].reshape(B, OUT_F) + bo_f


def init_params(key):
    """Deterministic parameter init mirroring the module's shapes."""
    ks = jax.random.split(key, 10)

    def lin(kw, kb, fan_in, fan_out):
        bound = 1.0 / jnp.sqrt(fan_in)
        w = jax.random.uniform(kw, (fan_out, fan_in), jnp.float32, -bound, bound)
        b = jax.random.uniform(kb, (fan_out,), jnp.float32, -bound, bound)
        return w, b

    w1, b1 = lin(ks[0], ks[1], IN_F, HID)
    w2, b2 = lin(ks[2], ks[3], HID, HID)
    wo, bo = lin(ks[4], ks[5], HID, OUT_F)

    # BatchNorm params / running stats (deterministic, non-trivial)
    g1 = 1.0 + 0.1 * jax.random.normal(ks[6], (HID,), jnp.float32)
    be1 = 0.1 * jax.random.normal(ks[7], (HID,), jnp.float32)
    rm1 = 0.05 * jax.random.normal(ks[8], (HID,), jnp.float32)
    rv1 = 1.0 + 0.1 * jnp.abs(jax.random.normal(ks[9], (HID,), jnp.float32))

    g2 = jnp.ones((HID,), jnp.float32)
    be2 = jnp.zeros((HID,), jnp.float32)
    rm2 = jnp.zeros((HID,), jnp.float32)
    rv2 = jnp.ones((HID,), jnp.float32)

    return (w1, b1, g1, be1, rm1, rv1,
            w2, b2, g2, be2, rm2, rv2,
            wo, bo)


def reference_forward(x, params):
    (w1, b1, g1, be1, rm1, rv1,
     w2, b2, g2, be2, rm2, rv2,
     wo, bo) = params
    h = jnp.maximum(x @ w1.T + b1, 0.0)
    h = (h - rm1) / jnp.sqrt(rv1 + BN_EPS) * g1 + be1
    h = jnp.maximum(h @ w2.T + b2, 0.0)
    h = (h - rm2) / jnp.sqrt(rv2 + BN_EPS) * g2 + be2
    # dropout eval = identity
    return h @ wo.T + bo


if __name__ == "__main__":
    key = jax.random.PRNGKey(0)
    kx, kx2, kx3, kp = jax.random.split(key, 4)

    params = init_params(kp)

    # small batch, bf16-MXU path
    B = 16
    x = jax.random.normal(kx, (B, IN_F), jnp.float32)
    ref = reference_forward(x, params)
    out = jax.block_until_ready(binary_classification_2layer(x, params))
    assert out.shape == (B, OUT_F)
    assert jnp.allclose(out, ref, atol=5e-2, rtol=5e-2), "bf16 kernel mismatch vs reference"

    # f32 compute path: validates the BN/bias folding tightly
    out_f32 = jax.block_until_ready(
        binary_classification_2layer(x, params, compute_dtype=jnp.float32))
    assert jnp.allclose(out_f32, ref, atol=1e-3, rtol=1e-3), "f32 kernel mismatch vs reference"

    # ragged batch exercises the zero-pad / slice path
    B2 = 13
    x2 = jax.random.normal(kx2, (B2, IN_F), jnp.float32)
    out2 = jax.block_until_ready(binary_classification_2layer(x2, params))
    ref2 = reference_forward(x2, params)
    assert out2.shape == (B2, OUT_F)
    assert jnp.allclose(out2, ref2, atol=5e-2, rtol=5e-2), "ragged-batch mismatch"

    # B > 256 exercises the multi-tile (>= 2 grid steps) path
    B3 = 300
    x3 = jax.random.normal(kx3, (B3, IN_F), jnp.float32)
    out3 = jax.block_until_ready(binary_classification_2layer(x3, params))
    ref3 = reference_forward(x3, params)
    assert out3.shape == (B3, OUT_F)
    assert jnp.allclose(out3, ref3, atol=5e-2, rtol=5e-2), "multi-tile mismatch"

    print("KERNEL_OK")
</pallas_src>

<mosaic_0001>
module attributes {stable_mosaic.version = 11 : i64} {
  func.func @_mlp_kernel(%arg0: i32, %arg1: memref<6x128xbf16, #tpu.memory_space<vmem>>, %arg2: memref<128x6xbf16, #tpu.memory_space<vmem>>, %arg3: memref<128x1xf32, #tpu.memory_space<vmem>>, %arg4: memref<128x128xbf16, #tpu.memory_space<vmem>>, %arg5: memref<128x1xf32, #tpu.memory_space<vmem>>, %arg6: memref<1x128xbf16, #tpu.memory_space<vmem>>, %arg7: memref<1x128xf32, #tpu.memory_space<vmem>>) attributes {dimension_semantics = [#tpu.dimension_semantics<parallel>], iteration_bounds = array<i64: 1>, scalar_prefetch = 0 : i64, scratch_operands = 0 : i64, tpu.core_type = #tpu.core_type<tc>, window_params = [{transform_indices = @transform_0, window_bounds = array<i64: 6, 128>}, {pipeline_mode = #tpu.pipeline_mode<synchronous>, transform_indices = @transform_1, window_bounds = array<i64: 128, 6>}, {pipeline_mode = #tpu.pipeline_mode<synchronous>, transform_indices = @transform_2, window_bounds = array<i64: 128, 1>}, {pipeline_mode = #tpu.pipeline_mode<synchronous>, transform_indices = @transform_3, window_bounds = array<i64: 128, 128>}, {pipeline_mode = #tpu.pipeline_mode<synchronous>, transform_indices = @transform_4, window_bounds = array<i64: 128, 1>}, {pipeline_mode = #tpu.pipeline_mode<synchronous>, transform_indices = @transform_5, window_bounds = array<i64: 1, 128>}, {transform_indices = @transform_6, window_bounds = array<i64: 1, 128>}]} {
    %c0 = arith.constant 0 : index
    %c0_0 = arith.constant 0 : index
    %0 = vector.load %arg2[%c0, %c0_0] : memref<128x6xbf16, #tpu.memory_space<vmem>>, vector<128x6xbf16>
    %c0_1 = arith.constant 0 : index
    %c0_2 = arith.constant 0 : index
    %1 = vector.load %arg1[%c0_1, %c0_2] : memref<6x128xbf16, #tpu.memory_space<vmem>>, vector<6x128xbf16>
    %cst = arith.constant dense<0.000000e+00> : vector<128x128xf32>
    %2 = tpu.matmul %0, %1, %cst {dimension_numbers = #tpu.dot_dimension_numbers<[1], [0], [0], [1], [0, 0, 1, 1], [], []>} : vector<128x6xbf16>, vector<6x128xbf16>, vector<128x128xf32> -> vector<128x128xf32>
    %c0_3 = arith.constant 0 : index
    %c0_4 = arith.constant 0 : index
    %3 = vector.load %arg3[%c0_3, %c0_4] : memref<128x1xf32, #tpu.memory_space<vmem>>, vector<128x1xf32>
    %4 = vector.broadcast %3 : vector<128x1xf32> to vector<128x128xf32>
    %5 = arith.addf %2, %4 : vector<128x128xf32>
    %cst_5 = arith.constant 0.000000e+00 : f32
    %6 = vector.broadcast %cst_5 : f32 to vector<128x128xf32>
    %7 = arith.maximumf %5, %6 : vector<128x128xf32>
    %8 = arith.truncf %7 : vector<128x128xf32> to vector<128x128xbf16>
    %c0_6 = arith.constant 0 : index
    %c0_7 = arith.constant 0 : index
    %9 = vector.load %arg4[%c0_6, %c0_7] : memref<128x128xbf16, #tpu.memory_space<vmem>>, vector<128x128xbf16>
    %cst_8 = arith.constant dense<0.000000e+00> : vector<128x128xf32>
    %10 = tpu.matmul %9, %8, %cst_8 {dimension_numbers = #tpu.dot_dimension_numbers<[1], [0], [0], [1], [0, 0, 1, 1], [], []>} : vector<128x128xbf16>, vector<128x128xbf16>, vector<128x128xf32> -> vector<128x128xf32>
    %c0_9 = arith.constant 0 : index
    %c0_10 = arith.constant 0 : index
    %11 = vector.load %arg5[%c0_9, %c0_10] : memref<128x1xf32, #tpu.memory_space<vmem>>, vector<128x1xf32>
    %12 = vector.broadcast %11 : vector<128x1xf32> to vector<128x128xf32>
    %13 = arith.addf %10, %12 : vector<128x128xf32>
    %cst_11 = arith.constant 0.000000e+00 : f32
    %14 = vector.broadcast %cst_11 : f32 to vector<128x128xf32>
    %15 = arith.maximumf %13, %14 : vector<128x128xf32>
    %16 = arith.truncf %15 : vector<128x128xf32> to vector<128x128xbf16>
    %c0_12 = arith.constant 0 : index
    %c0_13 = arith.constant 0 : index
    %17 = vector.load %arg6[%c0_12, %c0_13] : memref<1x128xbf16, #tpu.memory_space<vmem>>, vector<1x128xbf16>
    %cst_14 = arith.constant dense<0.000000e+00> : vector<1x128xf32>
    %18 = tpu.matmul %17, %16, %cst_14 {dimension_numbers = #tpu.dot_dimension_numbers<[1], [0], [0], [1], [0, 0, 1, 1], [], []>} : vector<1x128xbf16>, vector<128x128xbf16>, vector<1x128xf32> -> vector<1x128xf32>
    %c0_15 = arith.constant 0 : index
    %c0_16 = arith.constant 0 : index
    %19 = vector.load %arg7[%c0_15, %c0_16] : memref<1x128xf32, #tpu.memory_space<vmem>>, vector<1x128xf32>
    tpu.vector_store %arg7[%c0_15, %c0_16], %18 {strides = array<i32>} : memref<1x128xf32, #tpu.memory_space<vmem>>, vector<1x128xf32>,
    return
  }
  func.func @transform_0(%arg0: i32) -> (i32, i32) {
    %c0_i32 = arith.constant 0 : i32
    %c0_i32_0 = arith.constant 0 : i32
    return %c0_i32, %arg0 : i32, i32
  }
  func.func @transform_1(%arg0: i32) -> (i32, i32) {
    %c0_i32 = arith.constant 0 : i32
    %c0_i32_0 = arith.constant 0 : i32
    %c0_i32_1 = arith.constant 0 : i32
    return %c0_i32, %c0_i32_0 : i32, i32
  }
  func.func @transform_2(%arg0: i32) -> (i32, i32) {
    %c0_i32 = arith.constant 0 : i32
    %c0_i32_0 = arith.constant 0 : i32
    %c0_i32_1 = arith.constant 0 : i32
    return %c0_i32, %c0_i32_0 : i32, i32
  }
  func.func @transform_3(%arg0: i32) -> (i32, i32) {
    %c0_i32 = arith.constant 0 : i32
    %c0_i32_0 = arith.constant 0 : i32
    %c0_i32_1 = arith.constant 0 : i32
    return %c0_i32, %c0_i32_0 : i32, i32
  }
  func.func @transform_4(%arg0: i32) -> (i32, i32) {
    %c0_i32 = arith.constant 0 : i32
    %c0_i32_0 = arith.constant 0 : i32
    %c0_i32_1 = arith.constant 0 : i32
    return %c0_i32, %c0_i32_0 : i32, i32
  }
  func.func @transform_5(%arg0: i32) -> (i32, i32) {
    %c0_i32 = arith.constant 0 : i32
    %c0_i32_0 = arith.constant 0 : i32
    %c0_i32_1 = arith.constant 0 : i32
    return %c0_i32, %c0_i32_0 : i32, i32
  }
  func.func @transform_6(%arg0: i32) -> (i32, i32) {
    %c0_i32 = arith.constant 0 : i32
    %c0_i32_0 = arith.constant 0 : i32
    return %c0_i32, %arg0 : i32, i32
  }
}

</mosaic_0001>

<llo_original>
// kernel: binary_classification_2layer.1
$region0: #{binary_classification_2layer.1}
  #allocation0 [shape = 'u32[]', space=smem, size = 0x4, offset = 0x4, fixed_abs, tag = 'smem constant byte address 0x4 - core index']
  #allocation1 [shape = 'u32[144,128]{1,0:T(1,128)}', space=vmem, size = 0x12000, scoped, tag = 'internal scratch']
  %s0 = inlined_call_operand.vmem [shape: bf16[6,128], index: 0, kind: input, shape index: {}]
  %s1 = inlined_call_operand.vmem [shape: bf16[128,6], index: 1, kind: input, shape index: {}]
  %s2 = inlined_call_operand.vmem [shape: f32[128,1], index: 2, kind: input, shape index: {}]
  %s3 = inlined_call_operand.vmem [shape: bf16[128,128], index: 3, kind: input, shape index: {}]
  %s4 = inlined_call_operand.vmem [shape: f32[128,1], index: 4, kind: input, shape index: {}]
  %s5 = inlined_call_operand.vmem [shape: bf16[1,128], index: 5, kind: input, shape index: {}]
  %s6 = inlined_call_operand.vmem [shape: f32[1,128], index: 6, kind: output, shape index: {}]
  %s7 = sld [smem:[#allocation0]]
  $region34: #{binary_classification_2layer.1} parent=0
    _
  %s9 = ssub.s32 1, %s7
  %s10 = scalar_select 0, %s9, %s7
  // Predicated region
  $region2: #{binary_classification_2layer.1} parent=0 // pred_check
    _
  $region3: #{binary_classification_2layer.1} parent=0 // pred_check_branch
    %12 = sbr.rel (0) target = $region5
  $region4: #{binary_classification_2layer.1} parent=0 // pred_region
    _
  $region5: #{binary_classification_2layer.1} parent=0 // pred_fallthru
    _
  // Predicated region
  $region6: #{binary_classification_2layer.1} parent=0 // pred_check
    _
  $region7: #{binary_classification_2layer.1} parent=0 // pred_check_branch
    %14 = sbr.rel (0) target = $region9
  $region8: #{binary_classification_2layer.1} parent=0 // pred_region
    _
  $region9: #{binary_classification_2layer.1} parent=0 // pred_fallthru
    _
  // Predicated region
  $region10: #{binary_classification_2layer.1} parent=0 // pred_check
    _
  $region11: #{binary_classification_2layer.1} parent=0 // pred_check_branch
    %16 = sbr.rel (0) target = $region13
  $region12: #{binary_classification_2layer.1} parent=0 // pred_region
    _
  $region13: #{binary_classification_2layer.1} parent=0 // pred_fallthru
    _
  // Predicated region
  $region14: #{binary_classification_2layer.1} parent=0 // pred_check
    _
  $region15: #{binary_classification_2layer.1} parent=0 // pred_check_branch
    %18 = sbr.rel (0) target = $region17
  $region16: #{binary_classification_2layer.1} parent=0 // pred_region
    _
  $region17: #{binary_classification_2layer.1} parent=0 // pred_fallthru
    _
  // Predicated region
  $region18: #{binary_classification_2layer.1} parent=0 // pred_check
    _
  $region19: #{binary_classification_2layer.1} parent=0 // pred_check_branch
    %20 = sbr.rel (0) target = $region21
  $region20: #{binary_classification_2layer.1} parent=0 // pred_region
    _
  $region21: #{binary_classification_2layer.1} parent=0 // pred_fallthru
    _
  // Predicated region
  $region22: #{binary_classification_2layer.1} parent=0 // pred_check
    _
  $region23: #{binary_classification_2layer.1} parent=0 // pred_check_branch
    %22 = sbr.rel (0) target = $region25
  $region24: #{binary_classification_2layer.1} parent=0 // pred_region
    _
  $region25: #{binary_classification_2layer.1} parent=0 // pred_fallthru
    _
  %v24 = vld [vmem:[%s1] sm:$0xf]
  %v25 = vld [vmem:[%s1 + $0x4] sm:$0xf]
  %v26 = vld [vmem:[%s1 + $0x8] sm:$0xf]
  %v27 = vld [vmem:[%s1 + $0xc] sm:$0xf]
  %v28 = vld [vmem:[%s1 + $0x10] sm:$0xf]
  %v29 = vld [vmem:[%s1 + $0x14] sm:$0xf]
  %v30 = vld [vmem:[%s1 + $0x18] sm:$0xf]
  %v31 = vld [vmem:[%s1 + $0x1c] sm:$0xf]
  %v32 = vld [vmem:[%s1 + $0x20] sm:$0xf]
  %v33 = vld [vmem:[%s1 + $0x24] sm:$0xf]
  %v34 = vld [vmem:[%s1 + $0x28] sm:$0xf]
  %v35 = vld [vmem:[%s1 + $0x2c] sm:$0xf]
  %v36 = vld [vmem:[%s1 + $0x30] sm:$0xf]
  %v37 = vld [vmem:[%s1 + $0x34] sm:$0xf]
  %v38 = vld [vmem:[%s1 + $0x38] sm:$0xf]
  %v39 = vld [vmem:[%s1 + $0x3c] sm:$0xf]
  %v40 = vld [vmem:[%s0] sm:$0x7]
  %v41 = vld [vmem:[%s2] sm:$0xff]
  %v42 = vld [vmem:[%s2 + $0x8] sm:$0xff]
  %v43 = vld [vmem:[%s2 + $0x10] sm:$0xff]
  %v44 = vld [vmem:[%s2 + $0x18] sm:$0xff]
  %v45 = vld [vmem:[%s2 + $0x20] sm:$0xff]
  %v46 = vld [vmem:[%s2 + $0x28] sm:$0xff]
  %v47 = vld [vmem:[%s2 + $0x30] sm:$0xff]
  %v48 = vld [vmem:[%s2 + $0x38] sm:$0xff]
  %v49 = vld [vmem:[%s2 + $0x40] sm:$0xff]
  %v50 = vld [vmem:[%s2 + $0x48] sm:$0xff]
  %v51 = vld [vmem:[%s2 + $0x50] sm:$0xff]
  %v52 = vld [vmem:[%s2 + $0x58] sm:$0xff]
  %v53 = vld [vmem:[%s2 + $0x60] sm:$0xff]
  %v54 = vld [vmem:[%s2 + $0x68] sm:$0xff]
  %v55 = vld [vmem:[%s2 + $0x70] sm:$0xff]
  %v56 = vld [vmem:[%s2 + $0x78] sm:$0xff]
  %58 = vset.pattern.permute.xlu0 0
  %59 = vperm.xlu0 %58, %v41
  %v60 = vpop.permute.xlu0 %59
  %63 = vset.pattern.permute.xlu0 0
  %64 = vperm.xlu0 %63, %v42
  %v65 = vpop.permute.xlu0 %64
  %68 = vset.pattern.permute.xlu0 0
  %69 = vperm.xlu0 %68, %v43
  %v70 = vpop.permute.xlu0 %69
  %73 = vset.pattern.permute.xlu0 0
  %74 = vperm.xlu0 %73, %v44
  %v75 = vpop.permute.xlu0 %74
  %78 = vset.pattern.permute.xlu0 0
  %79 = vperm.xlu0 %78, %v45
  %v80 = vpop.permute.xlu0 %79
  %83 = vset.pattern.permute.xlu0 0
  %84 = vperm.xlu0 %83, %v46
  %v85 = vpop.permute.xlu0 %84
  %88 = vset.pattern.permute.xlu0 0
  %89 = vperm.xlu0 %88, %v47
  %v90 = vpop.permute.xlu0 %89
  %93 = vset.pattern.permute.xlu0 0
  %94 = vperm.xlu0 %93, %v48
  %v95 = vpop.permute.xlu0 %94
  %98 = vset.pattern.permute.xlu0 0
  %99 = vperm.xlu0 %98, %v49
  %v100 = vpop.permute.xlu0 %99
  %103 = vset.pattern.permute.xlu0 0
  %104 = vperm.xlu0 %103, %v50
  %v105 = vpop.permute.xlu0 %104
  %108 = vset.pattern.permute.xlu0 0
  %109 = vperm.xlu0 %108, %v51
  %v110 = vpop.permute.xlu0 %109
  %113 = vset.pattern.permute.xlu0 0
  %114 = vperm.xlu0 %113, %v52
  %v115 = vpop.permute.xlu0 %114
  %118 = vset.pattern.permute.xlu0 0
  %119 = vperm.xlu0 %118, %v53
  %v120 = vpop.permute.xlu0 %119
  %123 = vset.pattern.permute.xlu0 0
  %124 = vperm.xlu0 %123, %v54
  %v125 = vpop.permute.xlu0 %124
  %128 = vset.pattern.permute.xlu0 0
  %129 = vperm.xlu0 %128, %v55
  %v130 = vpop.permute.xlu0 %129
  %133 = vset.pattern.permute.xlu0 0
  %134 = vperm.xlu0 %133, %v56
  %v135 = vpop.permute.xlu0 %134
  %v153 = vunpack.c.l.b16 %v24
  %v154 = vunpack.c.l.b16 %v25
  %v155 = vunpack.c.l.b16 %v26
  %v156 = vunpack.c.l.b16 %v27
  %v157 = vunpack.c.l.b16 %v28
  %v158 = vunpack.c.l.b16 %v29
  %v159 = vunpack.c.l.b16 %v30
  %v160 = vunpack.c.l.b16 %v31
  %v161 = vunpack.c.l.b16 %v32
  %v162 = vunpack.c.l.b16 %v33
  %v163 = vunpack.c.l.b16 %v34
  %v164 = vunpack.c.l.b16 %v35
  %v165 = vunpack.c.l.b16 %v36
  %v166 = vunpack.c.l.b16 %v37
  %v167 = vunpack.c.l.b16 %v38
  %v168 = vunpack.c.l.b16 %v39
  %v169 = vpack.c.b16 %v154, %v153
  %v170 = vpack.c.b16 %v156, %v155
  %v171 = vpack.c.b16 %v158, %v157
  %v172 = vpack.c.b16 %v160, %v159
  %v173 = vpack.c.b16 %v162, %v161
  %v174 = vpack.c.b16 %v164, %v163
  %v175 = vpack.c.b16 %v166, %v165
  %v176 = vpack.c.b16 %v168, %v167
  %vm177 = vcmask 48128
  %v179 = vsel %vm177, %v169, 0
  %v182 = vsel %vm177, %v170, 0
  %v185 = vsel %vm177, %v171, 0
  %v188 = vsel %vm177, %v172, 0
  %v191 = vsel %vm177, %v173, 0
  %v194 = vsel %vm177, %v174, 0
  %v197 = vsel %vm177, %v175, 0
  %v200 = vsel %vm177, %v176, 0
  %vm202 = vcmask 1042432
  %v204 = vsel %vm202, %v40, 0
  %206 = vmatprep.subr.bf16.mxu0 0
  %207 = vmatpush1.bf16.msra.mxu0 0
  %208 = vmatprep.subr.bf16.mxu0 0
  %209 = vmatpush1.bf16.msra.mxu0 0
  %210 = vmatprep.subr.bf16.mxu0 0
  %211 = vmatpush1.bf16.msra.mxu0 0
  %212 = vmatprep.subr.bf16.mxu0 0
  %213 = vmatpush1.bf16.msra.mxu0 0
  %214 = vmatprep.subr.bf16.mxu0 0
  %215 = vmatpush1.bf16.msra.mxu0 0
  %216 = vmatprep.subr.bf16.mxu0 0
  %217 = vmatpush1.bf16.msra.mxu0 0
  %218 = vmatprep.subr.bf16.mxu0 0
  %219 = vmatpush1.bf16.msra.mxu0 0
  %220 = vmatprep.subr.bf16.mxu0 0
  %221 = vmatpush1.bf16.msra.mxu0 %v204
  %222 = vmatprep.subr.bf16.mxu0 0
  %223 = vmatpush2.bf16.msra.mxu0 0
  %224 = vmatprep.subr.bf16.mxu0 0
  %225 = vmatpush2.bf16.msra.mxu0 0
  %226 = vmatprep.subr.bf16.mxu0 0
  %227 = vmatpush2.bf16.msra.mxu0 0
  %228 = vmatprep.subr.bf16.mxu0 0
  %229 = vmatpush2.bf16.msra.mxu0 0
  %230 = vmatprep.subr.bf16.mxu0 0
  %231 = vmatpush2.bf16.msra.mxu0 0
  %232 = vmatprep.subr.bf16.mxu0 0
  %233 = vmatpush2.bf16.msra.mxu0 0
  %234 = vmatprep.subr.bf16.mxu0 0
  %235 = vmatpush2.bf16.msra.mxu0 0
  %236 = vmatprep.subr.bf16.mxu0 0
  %237 = vmatpush2.bf16.msra.mxu0 0
  %238 = vmatprep.mubr.bf16.mxu0 0
  %239 = vmatmul.mubr.bf16.gmra.mxu0 %v179
  %v240 = vpop.f32.mrf.mxu0
  %v241 = vadd.f32 %v60, %v240
  %v242 = vpop.f32.mrf.mxu0
  %v243 = vpop.f32.mrf.mxu0
  %v244 = vadd.f32 %v65, %v243
  %v245 = vpop.f32.mrf.mxu0
  %246 = vmatprep.mubr.bf16.mxu0 0
  %247 = vmatmul.mubr.bf16.gmra.mxu0 %v182
  %v248 = vpop.f32.mrf.mxu0
  %v249 = vadd.f32 %v70, %v248
  %v250 = vpop.f32.mrf.mxu0
  %v251 = vpop.f32.mrf.mxu0
  %v252 = vadd.f32 %v75, %v251
  %v253 = vpop.f32.mrf.mxu0
  %254 = vmatprep.mubr.bf16.mxu0 0
  %255 = vmatmul.mubr.bf16.gmra.mxu0 %v185
  %v256 = vpop.f32.mrf.mxu0
  %v257 = vadd.f32 %v80, %v256
  %v258 = vpop.f32.mrf.mxu0
  %v259 = vpop.f32.mrf.mxu0
  %v260 = vadd.f32 %v85, %v259
  %v261 = vpop.f32.mrf.mxu0
  %262 = vmatprep.mubr.bf16.mxu0 0
  %263 = vmatmul.mubr.bf16.gmra.mxu0 %v188
  %v264 = vpop.f32.mrf.mxu0
  %v265 = vadd.f32 %v90, %v264
  %v266 = vpop.f32.mrf.mxu0
  %v267 = vpop.f32.mrf.mxu0
  %v268 = vadd.f32 %v95, %v267
  %v269 = vpop.f32.mrf.mxu0
  %270 = vmatprep.mubr.bf16.mxu0 0
  %271 = vmatmul.mubr.bf16.gmra.mxu0 %v191
  %v272 = vpop.f32.mrf.mxu0
  %v273 = vadd.f32 %v100, %v272
  %v274 = vpop.f32.mrf.mxu0
  %v275 = vpop.f32.mrf.mxu0
  %v276 = vadd.f32 %v105, %v275
  %v277 = vpop.f32.mrf.mxu0
  %278 = vmatprep.mubr.bf16.mxu0 0
  %279 = vmatmul.mubr.bf16.gmra.mxu0 %v194
  %v280 = vpop.f32.mrf.mxu0
  %v281 = vadd.f32 %v110, %v280
  %v282 = vpop.f32.mrf.mxu0
  %v283 = vpop.f32.mrf.mxu0
  %v284 = vadd.f32 %v115, %v283
  %v285 = vpop.f32.mrf.mxu0
  %286 = vmatprep.mubr.bf16.mxu0 0
  %287 = vmatmul.mubr.bf16.gmra.mxu0 %v197
  %v288 = vpop.f32.mrf.mxu0
  %v289 = vadd.f32 %v120, %v288
  %v290 = vpop.f32.mrf.mxu0
  %v291 = vpop.f32.mrf.mxu0
  %v292 = vadd.f32 %v125, %v291
  %v293 = vpop.f32.mrf.mxu0
  %294 = vmatprep.mubr.bf16.mxu0 0
  %295 = vmatmul.mubr.bf16.gmra.mxu0 %v200
  %v296 = vpop.f32.mrf.mxu0
  %v297 = vadd.f32 %v130, %v296
  %v298 = vpop.f32.mrf.mxu0
  %v299 = vpop.f32.mrf.mxu0
  %v300 = vadd.f32 %v135, %v299
  %v301 = vpop.f32.mrf.mxu0
  %302 = vdwg.mxu0
  %v303 = vmax.f32 %v241, 0.0
  %v304 = vmax.f32 %v244, 0.0
  %v305 = vmax.f32 %v249, 0.0
  %v306 = vmax.f32 %v252, 0.0
  %v307 = vmax.f32 %v257, 0.0
  %v308 = vmax.f32 %v260, 0.0
  %v309 = vmax.f32 %v265, 0.0
  %v310 = vmax.f32 %v268, 0.0
  %v311 = vmax.f32 %v273, 0.0
  %v312 = vmax.f32 %v276, 0.0
  %v313 = vmax.f32 %v281, 0.0
  %v314 = vmax.f32 %v284, 0.0
  %v315 = vmax.f32 %v289, 0.0
  %v316 = vmax.f32 %v292, 0.0
  %v317 = vmax.f32 %v297, 0.0
  %v318 = vmax.f32 %v300, 0.0
  %v319 = vpack.c.bf16 %v304, %v303
  %v320 = vpack.c.bf16 %v306, %v305
  %v321 = vpack.c.bf16 %v308, %v307
  %v322 = vpack.c.bf16 %v310, %v309
  %v323 = vpack.c.bf16 %v312, %v311
  %v324 = vpack.c.bf16 %v314, %v313
  %v325 = vpack.c.bf16 %v316, %v315
  %v326 = vpack.c.bf16 %v318, %v317
  %v327 = vld [vmem:[%s3] sm:$0xf]
  %v328 = vld [vmem:[%s3 + $0x4] sm:$0xf]
  %v329 = vld [vmem:[%s3 + $0x8] sm:$0xf]
  %v330 = vld [vmem:[%s3 + $0xc] sm:$0xf]
  %v331 = vld [vmem:[%s3 + $0x10] sm:$0xf]
  %v332 = vld [vmem:[%s3 + $0x14] sm:$0xf]
  %v333 = vld [vmem:[%s3 + $0x18] sm:$0xf]
  %v334 = vld [vmem:[%s3 + $0x1c] sm:$0xf]
  %v335 = vld [vmem:[%s3 + $0x20] sm:$0xf]
  %v336 = vld [vmem:[%s3 + $0x24] sm:$0xf]
  %v337 = vld [vmem:[%s3 + $0x28] sm:$0xf]
  %v338 = vld [vmem:[%s3 + $0x2c] sm:$0xf]
  %v339 = vld [vmem:[%s3 + $0x30] sm:$0xf]
  %v340 = vld [vmem:[%s3 + $0x34] sm:$0xf]
  %v341 = vld [vmem:[%s3 + $0x38] sm:$0xf]
  %v342 = vld [vmem:[%s3 + $0x3c] sm:$0xf]
  %v343 = vld [vmem:[%s4] sm:$0xff]
  %v344 = vld [vmem:[%s4 + $0x8] sm:$0xff]
  %v345 = vld [vmem:[%s4 + $0x10] sm:$0xff]
  %v346 = vld [vmem:[%s4 + $0x18] sm:$0xff]
  %v347 = vld [vmem:[%s4 + $0x20] sm:$0xff]
  %v348 = vld [vmem:[%s4 + $0x28] sm:$0xff]
  %v349 = vld [vmem:[%s4 + $0x30] sm:$0xff]
  %v350 = vld [vmem:[%s4 + $0x38] sm:$0xff]
  %v351 = vld [vmem:[%s4 + $0x40] sm:$0xff]
  %v352 = vld [vmem:[%s4 + $0x48] sm:$0xff]
  %v353 = vld [vmem:[%s4 + $0x50] sm:$0xff]
  %v354 = vld [vmem:[%s4 + $0x58] sm:$0xff]
  %v355 = vld [vmem:[%s4 + $0x60] sm:$0xff]
  %v356 = vld [vmem:[%s4 + $0x68] sm:$0xff]
  %v357 = vld [vmem:[%s4 + $0x70] sm:$0xff]
  %v358 = vld [vmem:[%s4 + $0x78] sm:$0xff]
  %360 = vset.pattern.permute.xlu0 0
  %361 = vperm.xlu0 %360, %v343
  %v362 = vpop.permute.xlu0 %361
  %365 = vset.pattern.permute.xlu0 0
  %366 = vperm.xlu0 %365, %v344
  %v367 = vpop.permute.xlu0 %366
  %370 = vset.pattern.permute.xlu0 0
  %371 = vperm.xlu0 %370, %v345
  %v372 = vpop.permute.xlu0 %371
  %375 = vset.pattern.permute.xlu0 0
  %376 = vperm.xlu0 %375, %v346
  %v377 = vpop.permute.xlu0 %376
  %380 = vset.pattern.permute.xlu0 0
  %381 = vperm.xlu0 %380, %v347
  %v382 = vpop.permute.xlu0 %381
  %385 = vset.pattern.permute.xlu0 0
  %386 = vperm.xlu0 %385, %v348
  %v387 = vpop.permute.xlu0 %386
  %390 = vset.pattern.permute.xlu0 0
  %391 = vperm.xlu0 %390, %v349
  %v392 = vpop.permute.xlu0 %391
  %395 = vset.pattern.permute.xlu0 0
  %396 = vperm.xlu0 %395, %v350
  %v397 = vpop.permute.xlu0 %396
  %400 = vset.pattern.permute.xlu0 0
  %401 = vperm.xlu0 %400, %v351
  %v402 = vpop.permute.xlu0 %401
  %405 = vset.pattern.permute.xlu0 0
  %406 = vperm.xlu0 %405, %v352
  %v407 = vpop.permute.xlu0 %406
  %410 = vset.pattern.permute.xlu0 0
  %411 = vperm.xlu0 %410, %v353
  %v412 = vpop.permute.xlu0 %411
  %415 = vset.pattern.permute.xlu0 0
  %416 = vperm.xlu0 %415, %v354
  %v417 = vpop.permute.xlu0 %416
  %420 = vset.pattern.permute.xlu0 0
  %421 = vperm.xlu0 %420, %v355
  %v422 = vpop.permute.xlu0 %421
  %425 = vset.pattern.permute.xlu0 0
  %426 = vperm.xlu0 %425, %v356
  %v427 = vpop.permute.xlu0 %426
  %430 = vset.pattern.permute.xlu0 0
  %431 = vperm.xlu0 %430, %v357
  %v432 = vpop.permute.xlu0 %431
  %435 = vset.pattern.permute.xlu0 0
  %436 = vperm.xlu0 %435, %v358
  %v437 = vpop.permute.xlu0 %436
  %v455 = vunpack.c.l.b16 %v327
  %v456 = vunpack.c.l.b16 %v328
  %v457 = vunpack.c.l.b16 %v329
  %v458 = vunpack.c.l.b16 %v330
  %v459 = vunpack.c.l.b16 %v331
  %v460 = vunpack.c.l.b16 %v332
  %v461 = vunpack.c.l.b16 %v333
  %v462 = vunpack.c.l.b16 %v334
  %v463 = vunpack.c.l.b16 %v335
  %v464 = vunpack.c.l.b16 %v336
  %v465 = vunpack.c.l.b16 %v337
  %v466 = vunpack.c.l.b16 %v338
  %v467 = vunpack.c.l.b16 %v339
  %v468 = vunpack.c.l.b16 %v340
  %v469 = vunpack.c.l.b16 %v341
  %v470 = vunpack.c.l.b16 %v342
  %v471 = vpack.c.b16 %v456, %v455
  %v472 = vpack.c.b16 %v458, %v457
  %v473 = vpack.c.b16 %v460, %v459
  %v474 = vpack.c.b16 %v462, %v461
  %v475 = vpack.c.b16 %v464, %v463
  %v476 = vpack.c.b16 %v466, %v465
  %v477 = vpack.c.b16 %v468, %v467
  %v478 = vpack.c.b16 %v470, %v469
  %487 = vmatprep.subr.bf16.mxu0 0
  %488 = vmatpush1.bf16.msra.mxu0 %v326
  %489 = vmatprep.subr.bf16.mxu0 0
  %490 = vmatpush1.bf16.msra.mxu0 %v325
  %491 = vmatprep.subr.bf16.mxu0 0
  %492 = vmatpush1.bf16.msra.mxu0 %v324
  %493 = vmatprep.subr.bf16.mxu0 0
  %494 = vmatpush1.bf16.msra.mxu0 %v323
  %495 = vmatprep.subr.bf16.mxu0 0
  %496 = vmatpush1.bf16.msra.mxu0 %v322
  %497 = vmatprep.subr.bf16.mxu0 0
  %498 = vmatpush1.bf16.msra.mxu0 %v321
  %499 = vmatprep.subr.bf16.mxu0 0
  %500 = vmatpush1.bf16.msra.mxu0 %v320
  %501 = vmatprep.subr.bf16.mxu0 0
  %502 = vmatpush1.bf16.msra.mxu0 %v319
  %503 = vmatprep.subr.bf16.mxu0 0
  %504 = vmatpush2.bf16.msra.mxu0 0
  %505 = vmatprep.subr.bf16.mxu0 0
  %506 = vmatpush2.bf16.msra.mxu0 0
  %507 = vmatprep.subr.bf16.mxu0 0
  %508 = vmatpush2.bf16.msra.mxu0 0
  %509 = vmatprep.subr.bf16.mxu0 0
  %510 = vmatpush2.bf16.msra.mxu0 0
  %511 = vmatprep.subr.bf16.mxu0 0
  %512 = vmatpush2.bf16.msra.mxu0 0
  %513 = vmatprep.subr.bf16.mxu0 0
  %514 = vmatpush2.bf16.msra.mxu0 0
  %515 = vmatprep.subr.bf16.mxu0 0
  %516 = vmatpush2.bf16.msra.mxu0 0
  %517 = vmatprep.subr.bf16.mxu0 0
  %518 = vmatpush2.bf16.msra.mxu0 0
  %519 = vmatprep.mubr.bf16.mxu0 0
  %520 = vmatmul.mubr.bf16.gmra.mxu0 %v471
  %v521 = vpop.f32.mrf.mxu0
  %v522 = vadd.f32 %v362, %v521
  %v523 = vpop.f32.mrf.mxu0
  %v524 = vpop.f32.mrf.mxu0
  %v525 = vadd.f32 %v367, %v524
  %v526 = vpop.f32.mrf.mxu0
  %527 = vmatprep.mubr.bf16.mxu0 0
  %528 = vmatmul.mubr.bf16.gmra.mxu0 %v472
  %v529 = vpop.f32.mrf.mxu0
  %v530 = vadd.f32 %v372, %v529
  %v531 = vpop.f32.mrf.mxu0
  %v532 = vpop.f32.mrf.mxu0
  %v533 = vadd.f32 %v377, %v532
  %v534 = vpop.f32.mrf.mxu0
  %535 = vmatprep.mubr.bf16.mxu0 0
  %536 = vmatmul.mubr.bf16.gmra.mxu0 %v473
  %v537 = vpop.f32.mrf.mxu0
  %v538 = vadd.f32 %v382, %v537
  %v539 = vpop.f32.mrf.mxu0
  %v540 = vpop.f32.mrf.mxu0
  %v541 = vadd.f32 %v387, %v540
  %v542 = vpop.f32.mrf.mxu0
  %543 = vmatprep.mubr.bf16.mxu0 0
  %544 = vmatmul.mubr.bf16.gmra.mxu0 %v474
  %v545 = vpop.f32.mrf.mxu0
  %v546 = vadd.f32 %v392, %v545
  %v547 = vpop.f32.mrf.mxu0
  %v548 = vpop.f32.mrf.mxu0
  %v549 = vadd.f32 %v397, %v548
  %v550 = vpop.f32.mrf.mxu0
  %551 = vmatprep.mubr.bf16.mxu0 0
  %552 = vmatmul.mubr.bf16.gmra.mxu0 %v475
  %v553 = vpop.f32.mrf.mxu0
  %v554 = vadd.f32 %v402, %v553
  %v555 = vpop.f32.mrf.mxu0
  %v556 = vpop.f32.mrf.mxu0
  %v557 = vadd.f32 %v407, %v556
  %v558 = vpop.f32.mrf.mxu0
  %559 = vmatprep.mubr.bf16.mxu0 0
  %560 = vmatmul.mubr.bf16.gmra.mxu0 %v476
  %v561 = vpop.f32.mrf.mxu0
  %v562 = vadd.f32 %v412, %v561
  %v563 = vpop.f32.mrf.mxu0
  %v564 = vpop.f32.mrf.mxu0
  %v565 = vadd.f32 %v417, %v564
  %v566 = vpop.f32.mrf.mxu0
  %567 = vmatprep.mubr.bf16.mxu0 0
  %568 = vmatmul.mubr.bf16.gmra.mxu0 %v477
  %v569 = vpop.f32.mrf.mxu0
  %v570 = vadd.f32 %v422, %v569
  %v571 = vpop.f32.mrf.mxu0
  %v572 = vpop.f32.mrf.mxu0
  %v573 = vadd.f32 %v427, %v572
  %v574 = vpop.f32.mrf.mxu0
  %575 = vmatprep.mubr.bf16.mxu0 0
  %576 = vmatmul.mubr.bf16.gmra.mxu0 %v478
  %v577 = vpop.f32.mrf.mxu0
  %v578 = vadd.f32 %v432, %v577
  %v579 = vpop.f32.mrf.mxu0
  %v580 = vpop.f32.mrf.mxu0
  %v581 = vadd.f32 %v437, %v580
  %v582 = vpop.f32.mrf.mxu0
  %583 = vdwg.mxu0
  %v584 = vmax.f32 %v522, 0.0
  %v585 = vmax.f32 %v525, 0.0
  %v586 = vmax.f32 %v530, 0.0
  %v587 = vmax.f32 %v533, 0.0
  %v588 = vmax.f32 %v538, 0.0
  %v589 = vmax.f32 %v541, 0.0
  %v590 = vmax.f32 %v546, 0.0
  %v591 = vmax.f32 %v549, 0.0
  %v592 = vmax.f32 %v554, 0.0
  %v593 = vmax.f32 %v557, 0.0
  %v594 = vmax.f32 %v562, 0.0
  %v595 = vmax.f32 %v565, 0.0
  %v596 = vmax.f32 %v570, 0.0
  %v597 = vmax.f32 %v573, 0.0
  %v598 = vmax.f32 %v578, 0.0
  %v599 = vmax.f32 %v581, 0.0
  %v600 = vpack.c.bf16 %v585, %v584
  %v601 = vpack.c.bf16 %v587, %v586
  %v602 = vpack.c.bf16 %v589, %v588
  %v603 = vpack.c.bf16 %v591, %v590
  %v604 = vpack.c.bf16 %v593, %v592
  %v605 = vpack.c.bf16 %v595, %v594
  %v606 = vpack.c.bf16 %v597, %v596
  %v607 = vpack.c.bf16 %v599, %v598
  %v608 = vld [vmem:[%s5] sm:$0x1]
  %609 = vmatprep.subr.bf16.mxu0 0
  %610 = vmatpush1.bf16.msra.mxu0 %v607
  %611 = vmatprep.subr.bf16.mxu0 0
  %612 = vmatpush1.bf16.msra.mxu0 %v606
  %613 = vmatprep.subr.bf16.mxu0 0
  %614 = vmatpush1.bf16.msra.mxu0 %v605
  %615 = vmatprep.subr.bf16.mxu0 0
  %616 = vmatpush1.bf16.msra.mxu0 %v604
  %617 = vmatprep.subr.bf16.mxu0 0
  %618 = vmatpush1.bf16.msra.mxu0 %v603
  %619 = vmatprep.subr.bf16.mxu0 0
  %620 = vmatpush1.bf16.msra.mxu0 %v602
  %621 = vmatprep.subr.bf16.mxu0 0
  %622 = vmatpush1.bf16.msra.mxu0 %v601
  %623 = vmatprep.subr.bf16.mxu0 0
  %624 = vmatpush1.bf16.msra.mxu0 %v600
  %625 = vmatprep.subr.bf16.mxu0 0
  %626 = vmatpush2.bf16.msra.mxu0 0
  %627 = vmatprep.subr.bf16.mxu0 0
  %628 = vmatpush2.bf16.msra.mxu0 0
  %629 = vmatprep.subr.bf16.mxu0 0
  %630 = vmatpush2.bf16.msra.mxu0 0
  %631 = vmatprep.subr.bf16.mxu0 0
  %632 = vmatpush2.bf16.msra.mxu0 0
  %633 = vmatprep.subr.bf16.mxu0 0
  %634 = vmatpush2.bf16.msra.mxu0 0
  %635 = vmatprep.subr.bf16.mxu0 0
  %636 = vmatpush2.bf16.msra.mxu0 0
  %637 = vmatprep.subr.bf16.mxu0 0
  %638 = vmatpush2.bf16.msra.mxu0 0
  %639 = vmatprep.subr.bf16.mxu0 0
  %640 = vmatpush2.bf16.msra.mxu0 0
  %641 = vmatprep.mubr.bf16.mxu0 0
  %642 = vmatmul.mubr.bf16.gmra.mxu0 %v608
  %v643 = vpop.f32.mrf.mxu0
  %v644 = vadd.f32 0.0, %v643
  %v645 = vpop.f32.mrf.mxu0
  %v646 = vpop.f32.mrf.mxu0
  %v647 = vpop.f32.mrf.mxu0
  %648 = vdwg.mxu0
  %649 = vst [vmem:[%s6] sm:$0x1] %v644
  // Predicated region
  $region26: #{binary_classification_2layer.1} parent=0 // pred_check
    _
  $region27: #{binary_classification_2layer.1} parent=0 // pred_check_branch
    %651 = sbr.rel (0) target = $region29
  $region28: #{binary_classification_2layer.1} parent=0 // pred_region
    _
  $region29: #{binary_classification_2layer.1} parent=0 // pred_fallthru
    _
  // Predicated region
  $region30: #{binary_classification_2layer.1} parent=0 // pred_check
    _
  $region31: #{binary_classification_2layer.1} parent=0 // pred_check_branch
    %653 = sbr.rel (0) target = $region33
  $region32: #{binary_classification_2layer.1} parent=0 // pred_region
    _
  $region33: #{binary_classification_2layer.1} parent=0 // pred_fallthru
    _

</llo_original>
